<compile_context>
chip_gen: v7x
topology: tpu7x:2x2x1
jax: 0.10.0
libtpu: 0.0.40
codegen_flags: <defaults>
</compile_context>

<pallas_src>
import jax
import jax.numpy as jnp
from jax.experimental import pallas as pl
from jax.experimental.pallas import tpu as pltpu


def _pick_batch_tile(batch):
    """batch is a multiple of 8; returns a tile size (multiple of 8) that divides it."""
    cands = [t for t in (128, 64, 32, 16, 8) if batch % t == 0]
    if not cands:
        return batch
    # v7x megacore only pays when the "parallel" batch axis has >= 2 grid points; prefer
    # >= 2 tiles whenever each tile still keeps >= 64 rows (keeps per-layer DMAs large).
    for t in cands:
        if batch // t >= 2 and t >= 64:
            return t
    return cands[0]


def _make_kernel(L, tb, H, layer0):
    def kernel(hs_hbm, q_ref, wh_ref, out_ref, hbuf_ref, sem_ref):
        i = pl.program_id(0)
        b0 = pl.multiple_of(i * tb, tb)

        # Start all L per-layer CLS-block DMAs (HBM -> VMEM) concurrently, then wait once.
        # Each copies rows [b0, b0+tb) and lanes [0, H) of layer (layer0 + l); lanes
        # [0, H) of a flattened (S*H) row are exactly token 0.
        copies = []
        for l in range(L):
            cp = pltpu.make_async_copy(
                hs_hbm.at[layer0 + l, pl.ds(b0, tb), pl.ds(0, H)],
                hbuf_ref.at[l],
                sem_ref.at[l],
            )
            cp.start()
            copies.append(cp)
        for cp in copies:
            cp.wait()

        q = q_ref[...].astype(jnp.float32)                        # (1, H)

        # Per-layer scores s_l[b] = q . h_l[b, :]  -> (tb, 1) each (lane reduction).
        scores = []
        for l in range(L):
            h_l = hbuf_ref[l].astype(jnp.float32)                 # (tb, H)
            scores.append(jnp.sum(h_l * q, axis=-1, keepdims=True))

        # Numerically stable softmax over the L layers, kept as (tb, 1) columns.
        m = scores[0]
        for s in scores[1:]:
            m = jnp.maximum(m, s)
        exps = [jnp.exp(s - m) for s in scores]
        denom = exps[0]
        for e in exps[1:]:
            denom = denom + e
        inv = pl.reciprocal(denom, approx=True)                   # EUP slot

        # ctx[b, :] = sum_l attn_l[b] * h_l[b, :], accumulated layer by layer
        # (no (L, tb, H) f32 temporary ever materialized).
        ctx = (exps[0] * inv) * hbuf_ref[0].astype(jnp.float32)   # (tb, H)
        for l in range(1, L):
            ctx = ctx + (exps[l] * inv) * hbuf_ref[l].astype(jnp.float32)

        # Final projection on the MXU with f32 accumulation; cast ctx to the weight
        # dtype so bf16 weights use the fast bf16 MXU path.
        wh = wh_ref[...]
        out_ref[...] = jnp.dot(
            ctx.astype(wh.dtype), wh, preferred_element_type=jnp.float32
        ).astype(out_ref.dtype)

    return kernel


def attention_pooling(all_hidden_states, q, w_h, num_layers=4, total_layers=25):
    """all_hidden_states: (total_layers, B, S, H) array, or a list/tuple of (B, S, H)."""
    L = num_layers

    if isinstance(all_hidden_states, (list, tuple)):
        # Stack ONLY the CLS rows of the last L layers (tiny (L, B, H) slab) instead of
        # stacking all total_layers full hidden states through HBM.
        assert len(all_hidden_states) == total_layers
        hs_src = jnp.stack([h[:, 0, :] for h in all_hidden_states[-L:]], axis=0)
        _, B, H = hs_src.shape
        layer0 = 0
    else:
        ah = all_hidden_states
        total, B, S, H = ah.shape
        assert total == total_layers
        if H % 128 == 0 and B % 8 == 0:
            # Fused CLS extraction: free reshape to (TOTAL, B, S*H); the kernel DMAs
            # layer (TOTAL-L+l), lanes [0, H) (== token 0) straight from HBM, so the
            # (L, B, H) CLS slab never round-trips through HBM.
            hs_src = ah.reshape(total, B, S * H)
            layer0 = total - L
        else:
            # Minimal gather of exactly the CLS rows (tiny (L, B, H) slab).
            hs_src = ah[total - L:, :, 0, :]
            layer0 = 0

    Ffc = w_h.shape[1]
    Fp = ((Ffc + 127) // 128) * 128                     # lane-dense output width
    wh_p = w_h if Fp == Ffc else jnp.pad(w_h, ((0, 0), (0, Fp - Ffc)))

    # Pad batch up to a multiple of 8 (sublane-friendly). Only ever applied to the small
    # CLS slab; the fused full-tensor path already requires B % 8 == 0.
    B_pad = ((B + 7) // 8) * 8
    if B_pad != B:
        hs_src = jnp.pad(hs_src, ((0, 0), (0, B_pad - B), (0, 0)))

    tb = _pick_batch_tile(B_pad)
    ntiles = B_pad // tb

    itemsize = jnp.dtype(hs_src.dtype).itemsize
    cost = pl.CostEstimate(
        flops=2 * B_pad * H * Fp + 6 * B_pad * L * H,
        transcendentals=B_pad * L,
        bytes_accessed=(itemsize * L * B_pad * H
                        + jnp.dtype(wh_p.dtype).itemsize * H * Fp
                        + 4 * B_pad * Fp
                        + jnp.dtype(q.dtype).itemsize * H),
    )

    # TODO(synk): mark q / w_h single-buffered (pipeline_mode=pl.Buffered(1)) once that
    # plumbing is verified on the deployed jax version; they are grid-invariant anyway.
    out = pl.pallas_call(
        _make_kernel(L, tb, H, layer0),
        out_shape=jax.ShapeDtypeStruct((B_pad, Fp), jnp.float32),
        grid=(ntiles,),
        in_specs=[
            pl.BlockSpec(memory_space=pl.ANY),             # stacked hidden states (HBM)
            pl.BlockSpec((1, H), lambda i: (0, 0)),        # q (resident)
            pl.BlockSpec((H, Fp), lambda i: (0, 0)),       # w_h (resident, lane-padded)
        ],
        out_specs=pl.BlockSpec((tb, Fp), lambda i: (i, 0)),
        scratch_shapes=[
            pltpu.VMEM((L, tb, H), hs_src.dtype),          # per-tile CLS blocks (kept narrow)
            pltpu.SemaphoreType.DMA((L,)),
        ],
        compiler_params=pltpu.CompilerParams(
            dimension_semantics=("parallel",),
            vmem_limit_bytes=32 * 1024 * 1024,
        ),
        cost_estimate=cost,
    )(hs_src, q, wh_p)

    if B_pad != B or Fp != Ffc:
        out = out[:B, :Ffc]
    return out


if __name__ == "__main__":
    # Shapes consistent with the module (scaled down): hidden_size=128 (lane multiple,
    # standing in for deberta-v3-large's 1024), hiddendim_fc=64, num_layers=4, total=25.
    L, TOTAL = 4, 25
    H, Ffc = 128, 64

    key = jax.random.PRNGKey(0)
    k_hs1, k_hs2, k_q, k_w = jax.random.split(key, 4)

    q = 0.1 * jax.random.normal(k_q, (1, H), dtype=jnp.float32)
    w_h = 0.1 * jax.random.normal(k_w, (H, Ffc), dtype=jnp.float32)

    def reference(ah):
        hs_cls = jnp.stack([ah[i, :, 0, :] for i in range(TOTAL - L, TOTAL)], axis=1)
        scores = jnp.einsum("h,blh->bl", q[0], hs_cls)
        attn = jax.nn.softmax(scores, axis=-1)
        ctx = jnp.einsum("bl,blh->bh", attn, hs_cls)
        return ctx @ w_h

    # Case 1: stacked (TOTAL, B, S, H) input, B=8  -> fused CLS-extraction path.
    B1, S1 = 8, 8
    ah1 = jax.random.normal(k_hs1, (TOTAL, B1, S1, H), dtype=jnp.float32)
    out1 = jax.block_until_ready(attention_pooling(ah1, q, w_h, L, TOTAL))
    ref1 = reference(ah1)
    assert out1.shape == (B1, Ffc), out1.shape
    assert jnp.allclose(out1, ref1, atol=1e-2, rtol=1e-2), float(jnp.max(jnp.abs(out1 - ref1)))

    # Case 2: python-list input, B=2 (small/odd batch -> padded CLS-slab path).
    B2, S2 = 2, 8
    ah2 = jax.random.normal(k_hs2, (TOTAL, B2, S2, H), dtype=jnp.float32)
    hidden_list = [ah2[i] for i in range(TOTAL)]
    out2 = jax.block_until_ready(attention_pooling(hidden_list, q, w_h, L, TOTAL))
    ref2 = reference(ah2)
    assert out2.shape == (B2, Ffc), out2.shape
    assert jnp.allclose(out2, ref2, atol=1e-2, rtol=1e-2), float(jnp.max(jnp.abs(out2 - ref2)))

    print("KERNEL_OK")
</pallas_src>

<mosaic_0001>
module attributes {stable_mosaic.version = 11 : i64} {
  func.func @kernel(%arg0: i32, %arg1: memref<25x8x1024xf32, #tpu.memory_space<any>>, %arg2: memref<1x128xf32, #tpu.memory_space<vmem>>, %arg3: memref<128x128xf32, #tpu.memory_space<vmem>>, %arg4: memref<8x128xf32, #tpu.memory_space<vmem>>, %arg5: memref<4x8x128xf32, #tpu.memory_space<vmem>>, %arg6: memref<4x!tpu.dma_semaphore, #tpu.memory_space<semaphore_mem>>) attributes {dimension_semantics = [#tpu.dimension_semantics<parallel>], iteration_bounds = array<i64: 1>, scalar_prefetch = 0 : i64, scratch_operands = 2 : i64, tpu.core_type = #tpu.core_type<tc>, window_params = [{}, {pipeline_mode = #tpu.pipeline_mode<synchronous>, transform_indices = @transform_1, window_bounds = array<i64: 1, 128>}, {pipeline_mode = #tpu.pipeline_mode<synchronous>, transform_indices = @transform_2, window_bounds = array<i64: 128, 128>}, {transform_indices = @transform_3, window_bounds = array<i64: 8, 128>}]} {
    %c8_i32 = arith.constant 8 : i32
    %0 = arith.muli %arg0, %c8_i32 : i32
    %1 = tpu.assume_multiple %0, 8 : i32
    %c21_i32 = arith.constant 21 : i32
    %c0_i32 = arith.constant 0 : i32
    %c0_i32_0 = arith.constant 0 : i32
    %c0_i32_1 = arith.constant 0 : i32
    %2 = tpu.memref_slice %arg1[%c21_i32, %1, %c0_i32_1] : memref<25x8x1024xf32, #tpu.memory_space<any>> -> memref<1x8x128xf32, #tpu.memory_space<any>>
    %3 = tpu.memref_squeeze %2 : memref<1x8x128xf32, #tpu.memory_space<any>> -> memref<8x128xf32, #tpu.memory_space<any>>
    %c0_i32_2 = arith.constant 0 : i32
    %c0_i32_3 = arith.constant 0 : i32
    %4 = tpu.memref_slice %arg5[%c0_i32, %c0_i32_2, %c0_i32_3] : memref<4x8x128xf32, #tpu.memory_space<vmem>> -> memref<1x8x128xf32, #tpu.memory_space<vmem>>
    %5 = tpu.memref_squeeze %4 : memref<1x8x128xf32, #tpu.memory_space<vmem>> -> memref<8x128xf32, #tpu.memory_space<vmem>>
    %6 = tpu.memref_slice %arg6[%c0_i32_0] : memref<4x!tpu.dma_semaphore, #tpu.memory_space<semaphore_mem>> -> memref<1x!tpu.dma_semaphore, #tpu.memory_space<semaphore_mem>>
    %7 = tpu.memref_squeeze %6 : memref<1x!tpu.dma_semaphore, #tpu.memory_space<semaphore_mem>> -> memref<!tpu.dma_semaphore, #tpu.memory_space<semaphore_mem>>
    tpu.enqueue_dma source(%3 : memref<8x128xf32, #tpu.memory_space<any>>) target(%5 : memref<8x128xf32, #tpu.memory_space<vmem>>) target_semaphore(%7 : memref<!tpu.dma_semaphore, #tpu.memory_space<semaphore_mem>>)
    %c22_i32 = arith.constant 22 : i32
    %c1_i32 = arith.constant 1 : i32
    %c1_i32_4 = arith.constant 1 : i32
    %c0_i32_5 = arith.constant 0 : i32
    %8 = tpu.memref_slice %arg1[%c22_i32, %1, %c0_i32_5] : memref<25x8x1024xf32, #tpu.memory_space<any>> -> memref<1x8x128xf32, #tpu.memory_space<any>>
    %9 = tpu.memref_squeeze %8 : memref<1x8x128xf32, #tpu.memory_space<any>> -> memref<8x128xf32, #tpu.memory_space<any>>
    %c0_i32_6 = arith.constant 0 : i32
    %c0_i32_7 = arith.constant 0 : i32
    %10 = tpu.memref_slice %arg5[%c1_i32, %c0_i32_6, %c0_i32_7] : memref<4x8x128xf32, #tpu.memory_space<vmem>> -> memref<1x8x128xf32, #tpu.memory_space<vmem>>
    %11 = tpu.memref_squeeze %10 : memref<1x8x128xf32, #tpu.memory_space<vmem>> -> memref<8x128xf32, #tpu.memory_space<vmem>>
    %12 = tpu.memref_slice %arg6[%c1_i32_4] : memref<4x!tpu.dma_semaphore, #tpu.memory_space<semaphore_mem>> -> memref<1x!tpu.dma_semaphore, #tpu.memory_space<semaphore_mem>>
    %13 = tpu.memref_squeeze %12 : memref<1x!tpu.dma_semaphore, #tpu.memory_space<semaphore_mem>> -> memref<!tpu.dma_semaphore, #tpu.memory_space<semaphore_mem>>
    tpu.enqueue_dma source(%9 : memref<8x128xf32, #tpu.memory_space<any>>) target(%11 : memref<8x128xf32, #tpu.memory_space<vmem>>) target_semaphore(%13 : memref<!tpu.dma_semaphore, #tpu.memory_space<semaphore_mem>>)
    %c23_i32 = arith.constant 23 : i32
    %c2_i32 = arith.constant 2 : i32
    %c2_i32_8 = arith.constant 2 : i32
    %c0_i32_9 = arith.constant 0 : i32
    %14 = tpu.memref_slice %arg1[%c23_i32, %1, %c0_i32_9] : memref<25x8x1024xf32, #tpu.memory_space<any>> -> memref<1x8x128xf32, #tpu.memory_space<any>>
    %15 = tpu.memref_squeeze %14 : memref<1x8x128xf32, #tpu.memory_space<any>> -> memref<8x128xf32, #tpu.memory_space<any>>
    %c0_i32_10 = arith.constant 0 : i32
    %c0_i32_11 = arith.constant 0 : i32
    %16 = tpu.memref_slice %arg5[%c2_i32, %c0_i32_10, %c0_i32_11] : memref<4x8x128xf32, #tpu.memory_space<vmem>> -> memref<1x8x128xf32, #tpu.memory_space<vmem>>
    %17 = tpu.memref_squeeze %16 : memref<1x8x128xf32, #tpu.memory_space<vmem>> -> memref<8x128xf32, #tpu.memory_space<vmem>>
    %18 = tpu.memref_slice %arg6[%c2_i32_8] : memref<4x!tpu.dma_semaphore, #tpu.memory_space<semaphore_mem>> -> memref<1x!tpu.dma_semaphore, #tpu.memory_space<semaphore_mem>>
    %19 = tpu.memref_squeeze %18 : memref<1x!tpu.dma_semaphore, #tpu.memory_space<semaphore_mem>> -> memref<!tpu.dma_semaphore, #tpu.memory_space<semaphore_mem>>
    tpu.enqueue_dma source(%15 : memref<8x128xf32, #tpu.memory_space<any>>) target(%17 : memref<8x128xf32, #tpu.memory_space<vmem>>) target_semaphore(%19 : memref<!tpu.dma_semaphore, #tpu.memory_space<semaphore_mem>>)
    %c24_i32 = arith.constant 24 : i32
    %c3_i32 = arith.constant 3 : i32
    %c3_i32_12 = arith.constant 3 : i32
    %c0_i32_13 = arith.constant 0 : i32
    %20 = tpu.memref_slice %arg1[%c24_i32, %1, %c0_i32_13] : memref<25x8x1024xf32, #tpu.memory_space<any>> -> memref<1x8x128xf32, #tpu.memory_space<any>>
    %21 = tpu.memref_squeeze %20 : memref<1x8x128xf32, #tpu.memory_space<any>> -> memref<8x128xf32, #tpu.memory_space<any>>
    %c0_i32_14 = arith.constant 0 : i32
    %c0_i32_15 = arith.constant 0 : i32
    %22 = tpu.memref_slice %arg5[%c3_i32, %c0_i32_14, %c0_i32_15] : memref<4x8x128xf32, #tpu.memory_space<vmem>> -> memref<1x8x128xf32, #tpu.memory_space<vmem>>
    %23 = tpu.memref_squeeze %22 : memref<1x8x128xf32, #tpu.memory_space<vmem>> -> memref<8x128xf32, #tpu.memory_space<vmem>>
    %24 = tpu.memref_slice %arg6[%c3_i32_12] : memref<4x!tpu.dma_semaphore, #tpu.memory_space<semaphore_mem>> -> memref<1x!tpu.dma_semaphore, #tpu.memory_space<semaphore_mem>>
    %25 = tpu.memref_squeeze %24 : memref<1x!tpu.dma_semaphore, #tpu.memory_space<semaphore_mem>> -> memref<!tpu.dma_semaphore, #tpu.memory_space<semaphore_mem>>
    tpu.enqueue_dma source(%21 : memref<8x128xf32, #tpu.memory_space<any>>) target(%23 : memref<8x128xf32, #tpu.memory_space<vmem>>) target_semaphore(%25 : memref<!tpu.dma_semaphore, #tpu.memory_space<semaphore_mem>>)
    %c21_i32_16 = arith.constant 21 : i32
    %c0_i32_17 = arith.constant 0 : i32
    %c0_i32_18 = arith.constant 0 : i32
    %c0_i32_19 = arith.constant 0 : i32
    %26 = tpu.memref_slice %arg1[%c21_i32_16, %1, %c0_i32_19] : memref<25x8x1024xf32, #tpu.memory_space<any>> -> memref<1x8x128xf32, #tpu.memory_space<any>>
    %27 = tpu.memref_squeeze %26 : memref<1x8x128xf32, #tpu.memory_space<any>> -> memref<8x128xf32, #tpu.memory_space<any>>
    %c0_i32_20 = arith.constant 0 : i32
    %c0_i32_21 = arith.constant 0 : i32
    %28 = tpu.memref_slice %arg5[%c0_i32_17, %c0_i32_20, %c0_i32_21] : memref<4x8x128xf32, #tpu.memory_space<vmem>> -> memref<1x8x128xf32, #tpu.memory_space<vmem>>
    %29 = tpu.memref_squeeze %28 : memref<1x8x128xf32, #tpu.memory_space<vmem>> -> memref<8x128xf32, #tpu.memory_space<vmem>>
    %30 = tpu.memref_slice %arg6[%c0_i32_18] : memref<4x!tpu.dma_semaphore, #tpu.memory_space<semaphore_mem>> -> memref<1x!tpu.dma_semaphore, #tpu.memory_space<semaphore_mem>>
    %31 = tpu.memref_squeeze %30 : memref<1x!tpu.dma_semaphore, #tpu.memory_space<semaphore_mem>> -> memref<!tpu.dma_semaphore, #tpu.memory_space<semaphore_mem>>
    tpu.wait_dma2 semaphore(%31 : memref<!tpu.dma_semaphore, #tpu.memory_space<semaphore_mem>>) src(%27 : memref<8x128xf32, #tpu.memory_space<any>>) dst(%29 : memref<8x128xf32, #tpu.memory_space<vmem>>)
    %c22_i32_22 = arith.constant 22 : i32
    %c1_i32_23 = arith.constant 1 : i32
    %c1_i32_24 = arith.constant 1 : i32
    %c0_i32_25 = arith.constant 0 : i32
    %32 = tpu.memref_slice %arg1[%c22_i32_22, %1, %c0_i32_25] : memref<25x8x1024xf32, #tpu.memory_space<any>> -> memref<1x8x128xf32, #tpu.memory_space<any>>
    %33 = tpu.memref_squeeze %32 : memref<1x8x128xf32, #tpu.memory_space<any>> -> memref<8x128xf32, #tpu.memory_space<any>>
    %c0_i32_26 = arith.constant 0 : i32
    %c0_i32_27 = arith.constant 0 : i32
    %34 = tpu.memref_slice %arg5[%c1_i32_23, %c0_i32_26, %c0_i32_27] : memref<4x8x128xf32, #tpu.memory_space<vmem>> -> memref<1x8x128xf32, #tpu.memory_space<vmem>>
    %35 = tpu.memref_squeeze %34 : memref<1x8x128xf32, #tpu.memory_space<vmem>> -> memref<8x128xf32, #tpu.memory_space<vmem>>
    %36 = tpu.memref_slice %arg6[%c1_i32_24] : memref<4x!tpu.dma_semaphore, #tpu.memory_space<semaphore_mem>> -> memref<1x!tpu.dma_semaphore, #tpu.memory_space<semaphore_mem>>
    %37 = tpu.memref_squeeze %36 : memref<1x!tpu.dma_semaphore, #tpu.memory_space<semaphore_mem>> -> memref<!tpu.dma_semaphore, #tpu.memory_space<semaphore_mem>>
    tpu.wait_dma2 semaphore(%37 : memref<!tpu.dma_semaphore, #tpu.memory_space<semaphore_mem>>) src(%33 : memref<8x128xf32, #tpu.memory_space<any>>) dst(%35 : memref<8x128xf32, #tpu.memory_space<vmem>>)
    %c23_i32_28 = arith.constant 23 : i32
    %c2_i32_29 = arith.constant 2 : i32
    %c2_i32_30 = arith.constant 2 : i32
    %c0_i32_31 = arith.constant 0 : i32
    %38 = tpu.memref_slice %arg1[%c23_i32_28, %1, %c0_i32_31] : memref<25x8x1024xf32, #tpu.memory_space<any>> -> memref<1x8x128xf32, #tpu.memory_space<any>>
    %39 = tpu.memref_squeeze %38 : memref<1x8x128xf32, #tpu.memory_space<any>> -> memref<8x128xf32, #tpu.memory_space<any>>
    %c0_i32_32 = arith.constant 0 : i32
    %c0_i32_33 = arith.constant 0 : i32
    %40 = tpu.memref_slice %arg5[%c2_i32_29, %c0_i32_32, %c0_i32_33] : memref<4x8x128xf32, #tpu.memory_space<vmem>> -> memref<1x8x128xf32, #tpu.memory_space<vmem>>
    %41 = tpu.memref_squeeze %40 : memref<1x8x128xf32, #tpu.memory_space<vmem>> -> memref<8x128xf32, #tpu.memory_space<vmem>>
    %42 = tpu.memref_slice %arg6[%c2_i32_30] : memref<4x!tpu.dma_semaphore, #tpu.memory_space<semaphore_mem>> -> memref<1x!tpu.dma_semaphore, #tpu.memory_space<semaphore_mem>>
    %43 = tpu.memref_squeeze %42 : memref<1x!tpu.dma_semaphore, #tpu.memory_space<semaphore_mem>> -> memref<!tpu.dma_semaphore, #tpu.memory_space<semaphore_mem>>
    tpu.wait_dma2 semaphore(%43 : memref<!tpu.dma_semaphore, #tpu.memory_space<semaphore_mem>>) src(%39 : memref<8x128xf32, #tpu.memory_space<any>>) dst(%41 : memref<8x128xf32, #tpu.memory_space<vmem>>)
    %c24_i32_34 = arith.constant 24 : i32
    %c3_i32_35 = arith.constant 3 : i32
    %c3_i32_36 = arith.constant 3 : i32
    %c0_i32_37 = arith.constant 0 : i32
    %44 = tpu.memref_slice %arg1[%c24_i32_34, %1, %c0_i32_37] : memref<25x8x1024xf32, #tpu.memory_space<any>> -> memref<1x8x128xf32, #tpu.memory_space<any>>
    %45 = tpu.memref_squeeze %44 : memref<1x8x128xf32, #tpu.memory_space<any>> -> memref<8x128xf32, #tpu.memory_space<any>>
    %c0_i32_38 = arith.constant 0 : i32
    %c0_i32_39 = arith.constant 0 : i32
    %46 = tpu.memref_slice %arg5[%c3_i32_35, %c0_i32_38, %c0_i32_39] : memref<4x8x128xf32, #tpu.memory_space<vmem>> -> memref<1x8x128xf32, #tpu.memory_space<vmem>>
    %47 = tpu.memref_squeeze %46 : memref<1x8x128xf32, #tpu.memory_space<vmem>> -> memref<8x128xf32, #tpu.memory_space<vmem>>
    %48 = tpu.memref_slice %arg6[%c3_i32_36] : memref<4x!tpu.dma_semaphore, #tpu.memory_space<semaphore_mem>> -> memref<1x!tpu.dma_semaphore, #tpu.memory_space<semaphore_mem>>
    %49 = tpu.memref_squeeze %48 : memref<1x!tpu.dma_semaphore, #tpu.memory_space<semaphore_mem>> -> memref<!tpu.dma_semaphore, #tpu.memory_space<semaphore_mem>>
    tpu.wait_dma2 semaphore(%49 : memref<!tpu.dma_semaphore, #tpu.memory_space<semaphore_mem>>) src(%45 : memref<8x128xf32, #tpu.memory_space<any>>) dst(%47 : memref<8x128xf32, #tpu.memory_space<vmem>>)
    %c0 = arith.constant 0 : index
    %c0_40 = arith.constant 0 : index
    %50 = vector.load %arg2[%c0, %c0_40] : memref<1x128xf32, #tpu.memory_space<vmem>>, vector<1x128xf32>
    %c0_41 = arith.constant 0 : index
    %c0_42 = arith.constant 0 : index
    %c0_43 = arith.constant 0 : index
    %51 = vector.load %arg5[%c0_41, %c0_42, %c0_43] : memref<4x8x128xf32, #tpu.memory_space<vmem>>, vector<1x8x128xf32>
    %52 = vector.shape_cast %51 : vector<1x8x128xf32> to vector<8x128xf32>
    %53 = vector.broadcast %50 : vector<1x128xf32> to vector<8x128xf32>
    %54 = arith.mulf %52, %53 : vector<8x128xf32>
    %cst = arith.constant dense<0.000000e+00> : vector<8xf32>
    %55 = vector.multi_reduction <add>, %54, %cst [1] : vector<8x128xf32> to vector<8xf32>
    %56 = vector.shape_cast %55 : vector<8xf32> to vector<8x1xf32>
    %c1 = arith.constant 1 : index
    %c0_44 = arith.constant 0 : index
    %c0_45 = arith.constant 0 : index
    %57 = vector.load %arg5[%c1, %c0_44, %c0_45] : memref<4x8x128xf32, #tpu.memory_space<vmem>>, vector<1x8x128xf32>
    %58 = vector.shape_cast %57 : vector<1x8x128xf32> to vector<8x128xf32>
    %59 = vector.broadcast %50 : vector<1x128xf32> to vector<8x128xf32>
    %60 = arith.mulf %58, %59 : vector<8x128xf32>
    %cst_46 = arith.constant dense<0.000000e+00> : vector<8xf32>
    %61 = vector.multi_reduction <add>, %60, %cst_46 [1] : vector<8x128xf32> to vector<8xf32>
    %62 = vector.shape_cast %61 : vector<8xf32> to vector<8x1xf32>
    %c2 = arith.constant 2 : index
    %c0_47 = arith.constant 0 : index
    %c0_48 = arith.constant 0 : index
    %63 = vector.load %arg5[%c2, %c0_47, %c0_48] : memref<4x8x128xf32, #tpu.memory_space<vmem>>, vector<1x8x128xf32>
    %64 = vector.shape_cast %63 : vector<1x8x128xf32> to vector<8x128xf32>
    %65 = vector.broadcast %50 : vector<1x128xf32> to vector<8x128xf32>
    %66 = arith.mulf %64, %65 : vector<8x128xf32>
    %cst_49 = arith.constant dense<0.000000e+00> : vector<8xf32>
    %67 = vector.multi_reduction <add>, %66, %cst_49 [1] : vector<8x128xf32> to vector<8xf32>
    %68 = vector.shape_cast %67 : vector<8xf32> to vector<8x1xf32>
    %c3 = arith.constant 3 : index
    %c0_50 = arith.constant 0 : index
    %c0_51 = arith.constant 0 : index
    %69 = vector.load %arg5[%c3, %c0_50, %c0_51] : memref<4x8x128xf32, #tpu.memory_space<vmem>>, vector<1x8x128xf32>
    %70 = vector.shape_cast %69 : vector<1x8x128xf32> to vector<8x128xf32>
    %71 = vector.broadcast %50 : vector<1x128xf32> to vector<8x128xf32>
    %72 = arith.mulf %70, %71 : vector<8x128xf32>
    %cst_52 = arith.constant dense<0.000000e+00> : vector<8xf32>
    %73 = vector.multi_reduction <add>, %72, %cst_52 [1] : vector<8x128xf32> to vector<8xf32>
    %74 = vector.shape_cast %73 : vector<8xf32> to vector<8x1xf32>
    %75 = arith.maximumf %56, %62 : vector<8x1xf32>
    %76 = arith.maximumf %75, %68 : vector<8x1xf32>
    %77 = arith.maximumf %76, %74 : vector<8x1xf32>
    %78 = arith.subf %56, %77 : vector<8x1xf32>
    %79 = math.exp %78 : vector<8x1xf32>
    %80 = arith.subf %62, %77 : vector<8x1xf32>
    %81 = math.exp %80 : vector<8x1xf32>
    %82 = arith.subf %68, %77 : vector<8x1xf32>
    %83 = math.exp %82 : vector<8x1xf32>
    %84 = arith.subf %74, %77 : vector<8x1xf32>
    %85 = math.exp %84 : vector<8x1xf32>
    %86 = arith.addf %79, %81 : vector<8x1xf32>
    %87 = arith.addf %86, %83 : vector<8x1xf32>
    %88 = arith.addf %87, %85 : vector<8x1xf32>
    %89 = tpu.reciprocal %88 {approx = true} : vector<8x1xf32> -> vector<8x1xf32>
    %90 = arith.mulf %79, %89 : vector<8x1xf32>
    %c0_53 = arith.constant 0 : index
    %c0_54 = arith.constant 0 : index
    %c0_55 = arith.constant 0 : index
    %91 = vector.load %arg5[%c0_53, %c0_54, %c0_55] : memref<4x8x128xf32, #tpu.memory_space<vmem>>, vector<1x8x128xf32>
    %92 = vector.shape_cast %91 : vector<1x8x128xf32> to vector<8x128xf32>
    %93 = vector.broadcast %90 : vector<8x1xf32> to vector<8x128xf32>
    %94 = arith.mulf %93, %92 : vector<8x128xf32>
    %95 = arith.mulf %81, %89 : vector<8x1xf32>
    %c1_56 = arith.constant 1 : index
    %c0_57 = arith.constant 0 : index
    %c0_58 = arith.constant 0 : index
    %96 = vector.load %arg5[%c1_56, %c0_57, %c0_58] : memref<4x8x128xf32, #tpu.memory_space<vmem>>, vector<1x8x128xf32>
    %97 = vector.shape_cast %96 : vector<1x8x128xf32> to vector<8x128xf32>
    %98 = vector.broadcast %95 : vector<8x1xf32> to vector<8x128xf32>
    %99 = arith.mulf %98, %97 : vector<8x128xf32>
    %100 = arith.addf %94, %99 : vector<8x128xf32>
    %101 = arith.mulf %83, %89 : vector<8x1xf32>
    %c2_59 = arith.constant 2 : index
    %c0_60 = arith.constant 0 : index
    %c0_61 = arith.constant 0 : index
    %102 = vector.load %arg5[%c2_59, %c0_60, %c0_61] : memref<4x8x128xf32, #tpu.memory_space<vmem>>, vector<1x8x128xf32>
    %103 = vector.shape_cast %102 : vector<1x8x128xf32> to vector<8x128xf32>
    %104 = vector.broadcast %101 : vector<8x1xf32> to vector<8x128xf32>
    %105 = arith.mulf %104, %103 : vector<8x128xf32>
    %106 = arith.addf %100, %105 : vector<8x128xf32>
    %107 = arith.mulf %85, %89 : vector<8x1xf32>
    %c3_62 = arith.constant 3 : index
    %c0_63 = arith.constant 0 : index
    %c0_64 = arith.constant 0 : index
    %108 = vector.load %arg5[%c3_62, %c0_63, %c0_64] : memref<4x8x128xf32, #tpu.memory_space<vmem>>, vector<1x8x128xf32>
    %109 = vector.shape_cast %108 : vector<1x8x128xf32> to vector<8x128xf32>
    %110 = vector.broadcast %107 : vector<8x1xf32> to vector<8x128xf32>
    %111 = arith.mulf %110, %109 : vector<8x128xf32>
    %112 = arith.addf %106, %111 : vector<8x128xf32>
    %c0_65 = arith.constant 0 : index
    %c0_66 = arith.constant 0 : index
    %113 = vector.load %arg3[%c0_65, %c0_66] : memref<128x128xf32, #tpu.memory_space<vmem>>, vector<128x128xf32>
    %cst_67 = arith.constant dense<0.000000e+00> : vector<8x128xf32>
    %114 = tpu.matmul %112, %113, %cst_67 {dimension_numbers = #tpu.dot_dimension_numbers<[1], [0], [0], [1], [0, 0, 1, 1], [], []>} : vector<8x128xf32>, vector<128x128xf32>, vector<8x128xf32> -> vector<8x128xf32>
    %c0_68 = arith.constant 0 : index
    %c0_69 = arith.constant 0 : index
    %115 = vector.load %arg4[%c0_68, %c0_69] : memref<8x128xf32, #tpu.memory_space<vmem>>, vector<8x128xf32>
    tpu.vector_store %arg4[%c0_68, %c0_69], %114 {strides = array<i32>} : memref<8x128xf32, #tpu.memory_space<vmem>>, vector<8x128xf32>,
    return
  }
  func.func @transform_1(%arg0: i32) -> (i32, i32) {
    %c0_i32 = arith.constant 0 : i32
    %c0_i32_0 = arith.constant 0 : i32
    %c0_i32_1 = arith.constant 0 : i32
    return %c0_i32, %c0_i32_0 : i32, i32
  }
  func.func @transform_2(%arg0: i32) -> (i32, i32) {
    %c0_i32 = arith.constant 0 : i32
    %c0_i32_0 = arith.constant 0 : i32
    %c0_i32_1 = arith.constant 0 : i32
    return %c0_i32, %c0_i32_0 : i32, i32
  }
  func.func @transform_3(%arg0: i32) -> (i32, i32) {
    %c0_i32 = arith.constant 0 : i32
    %c0_i32_0 = arith.constant 0 : i32
    return %arg0, %c0_i32 : i32, i32
  }
}

</mosaic_0001>

<llo_original>
// kernel: tpu_custom_call.1
$region0: #{tpu_custom_call.1}
  #allocation0 [shape = 'u32[]', space=smem, size = 0x4, offset = 0x4, fixed_abs, tag = 'smem constant byte address 0x4 - core index']
  #allocation1 [shape = 'u32[144,128]{1,0:T(1,128)}', space=vmem, size = 0x12000, scoped, tag = 'internal scratch']
  #allocation2 [shape = 'f32[4,8,128]{2,1,0:T(8,128)}', space=vmem, size = 0x4000, scoped, tag = 'scratch operand']
  #allocation3 [shape = 's32[4]{0}', space=sflag, size = 0x10, scoped, tag = 'scratch operand']
  #allocation8 [shape = 's32[]', space=sflag, size = 0x4, offset = 0, fixed_abs, tag = 'sflag constant byte address 0x0 - dummy sync flag']
  #allocation9 [shape = 's32[]', space=sflag, size = 0x4, offset = 0, fixed_abs, tag = 'sflag constant byte address 0x0 - dummy sync flag']
  #allocation10 [shape = 'u32[]', space=smem, size = 0x4, offset = 0x44, fixed_abs, tag = 'smem constant byte address 0x44 - assertion arg 0']
  #allocation11 [shape = 'u32[]', space=smem, size = 0x4, offset = 0x48, fixed_abs, tag = 'smem constant byte address 0x48 - assertion arg 1']
  #allocation12 [shape = 's32[]', space=sflag, size = 0x4, offset = 0, fixed_abs, tag = 'sflag constant byte address 0x0 - dummy sync flag']
  #allocation13 [shape = 's32[]', space=sflag, size = 0x4, offset = 0, fixed_abs, tag = 'sflag constant byte address 0x0 - dummy sync flag']
  #allocation14 [shape = 's32[]', space=sflag, size = 0x4, offset = 0, fixed_abs, tag = 'sflag constant byte address 0x0 - dummy sync flag']
  #allocation15 [shape = 's32[]', space=sflag, size = 0x4, offset = 0, fixed_abs, tag = 'sflag constant byte address 0x0 - dummy sync flag']
  #allocation16 [shape = 's32[]', space=sflag, size = 0x4, offset = 0, fixed_abs, tag = 'sflag constant byte address 0x0 - dummy sync flag']
  #allocation17 [shape = 's32[]', space=sflag, size = 0x4, offset = 0, fixed_abs, tag = 'sflag constant byte address 0x0 - dummy sync flag']
  %s0 = inlined_call_operand.hbm [shape: f32[25,8,1024], index: 0, kind: input, shape index: {}]
  %s1 = inlined_call_operand.vmem [shape: f32[1,128], index: 1, kind: input, shape index: {}]
  %s2 = inlined_call_operand.hbm [shape: f32[128,128], index: 2, kind: input, shape index: {}]
  %s3 = inlined_call_operand.hbm [shape: f32[8,128], index: 3, kind: output, shape index: {}]
  %s4 = sld [smem:[#allocation0]]
  $region38: #{tpu_custom_call.1} parent=0
    _
  %s6 = ssub.s32 1, %s4
  %s7 = scalar_select 0, %s6, %s4
  $region1: #{tpu_custom_call.1} parent=0
    #allocation4 [shape = 'u8[65536]{0}', space=vmem, size = 0x10000, scoped, tag = 'input window, operand 2, single buffered']
    #allocation5 [shape = 's32[1]{0}', space=sflag, size = 0x4, scoped, tag = 'scoped memory for tpu_custom_call.1']
    #allocation6 [shape = 's32[1]{0}', space=sflag, size = 0x4, scoped, tag = 'scoped memory for tpu_custom_call.1']
    #allocation7 [shape = 'u8[4096]{0}', space=vmem, size = 0x1000, scoped, tag = 'output window, operand 0, single buffered']
    %8 = vsyncpa [#allocation5], 0
    %9 = vsyncpa [#allocation6], 0
    // Predicated region
    $region2: #{tpu_custom_call.1} parent=1 // pred_check
      _
    $region3: #{tpu_custom_call.1} parent=1 // pred_check_branch
      %11 = sbr.rel (0) target = $region5
    $region4: #{tpu_custom_call.1} parent=1 // pred_region
      _
    $region5: #{tpu_custom_call.1} parent=1 // pred_fallthru
      _
    // Predicated region
    $region6: #{tpu_custom_call.1} parent=1 // pred_check
      _
    $region7: #{tpu_custom_call.1} parent=1 // pred_check_branch
      %13 = sbr.rel (0) target = $region9
    $region8: #{tpu_custom_call.1} parent=1 // pred_region
      %s15 = ssub.s32 2048, 2048
      %16 = vsyncadd [#allocation5], %s15
      %s17 = sshll.u32 [#allocation4], 4
      %s18 = int_to_ptr.vmem [resolvable:$true] %s17
      %23 = dma.hbm_to_vmem [thread:$0]  %s2, 2048, %s18, [#allocation5], 128, 128, 8
    $region9: #{tpu_custom_call.1} parent=1 // pred_fallthru
      _
    // Predicated region
    $region10: #{tpu_custom_call.1} parent=1 // pred_check
      _
    $region11: #{tpu_custom_call.1} parent=1 // pred_check_branch
      %25 = sbr.rel (0) target = $region13
    $region12: #{tpu_custom_call.1} parent=1 // pred_region
      %26 = dma.done [#allocation5], 2048
    $region13: #{tpu_custom_call.1} parent=1 // pred_fallthru
      _
    %s27 = smul.u32 0, 8
    %s28 = sshra.s32 %s27, 3
    %s29 = sand.u32 %s27, 7
    %s30 = smul.u32 %s28, 8
    %s31 = sadd.s32 %s30, 168
    %s32 = smul.addr %s31, 128
    %s33 = scalar_lea.hbm %s0, %s32
    // Predicated region
    $region14: #{tpu_custom_call.1} parent=1 // pred_check
      _
    $region15: #{tpu_custom_call.1} parent=1 // pred_check_branch
      %35 = sbr.rel target = $region17
    $region16: #{tpu_custom_call.1} parent=1 // pred_region
      %36 = sst [smem:[#allocation10]] [#allocation9]
      %37 = sst [smem:[#allocation11]] [#allocation8]
    $region17: #{tpu_custom_call.1} parent=1 // pred_fallthru
      _
    %39 = shalt.err (0)
    %s41 = sshll.u32 [#allocation2], 4
    %s42 = int_to_ptr.vmem [resolvable:$true] %s41
    %44 = dma.hbm_to_vmem [thread:$0]  %s33, 128, %s42, [#allocation3]
    %s45 = sadd.s32 %s30, 176
    %s46 = smul.addr %s45, 128
    %s47 = scalar_lea.hbm %s0, %s46
    %s48 = scalar_lea.vmem [#allocation2], 8
    %s49 = scalar_lea.sflag [#allocation3], 1
    // Predicated region
    $region18: #{tpu_custom_call.1} parent=1 // pred_check
      _
    $region19: #{tpu_custom_call.1} parent=1 // pred_check_branch
      %51 = sbr.rel target = $region21
    $region20: #{tpu_custom_call.1} parent=1 // pred_region
      %52 = sst [smem:[#allocation10]] [#allocation13]
      %53 = sst [smem:[#allocation11]] [#allocation12]
    $region21: #{tpu_custom_call.1} parent=1 // pred_fallthru
      _
    %55 = shalt.err (0)
    %s57 = sshll.u32 %s48, 4
    %s58 = int_to_ptr.vmem [resolvable:$true] %s57
    %60 = dma.hbm_to_vmem [thread:$0]  %s47, 128, %s58, %s49
    %s61 = sadd.s32 %s30, 184
    %s62 = smul.addr %s61, 128
    %s63 = scalar_lea.hbm %s0, %s62
    %s64 = scalar_lea.vmem [#allocation2], 16
    %s65 = scalar_lea.sflag [#allocation3], 2
    // Predicated region
    $region22: #{tpu_custom_call.1} parent=1 // pred_check
      _
    $region23: #{tpu_custom_call.1} parent=1 // pred_check_branch
      %67 = sbr.rel target = $region25
    $region24: #{tpu_custom_call.1} parent=1 // pred_region
      %68 = sst [smem:[#allocation10]] [#allocation15]
      %69 = sst [smem:[#allocation11]] [#allocation14]
    $region25: #{tpu_custom_call.1} parent=1 // pred_fallthru
      _
    %71 = shalt.err (0)
    %s73 = sshll.u32 %s64, 4
    %s74 = int_to_ptr.vmem [resolvable:$true] %s73
    %76 = dma.hbm_to_vmem [thread:$0]  %s63, 128, %s74, %s65
    %s77 = sadd.s32 %s30, 192
    %s78 = smul.addr %s77, 128
    %s79 = scalar_lea.hbm %s0, %s78
    %s80 = scalar_lea.vmem [#allocation2], 24
    %s81 = scalar_lea.sflag [#allocation3], 3
    // Predicated region
    $region26: #{tpu_custom_call.1} parent=1 // pred_check
      _
    $region27: #{tpu_custom_call.1} parent=1 // pred_check_branch
      %83 = sbr.rel target = $region29
    $region28: #{tpu_custom_call.1} parent=1 // pred_region
      %84 = sst [smem:[#allocation10]] [#allocation17]
      %85 = sst [smem:[#allocation11]] [#allocation16]
    $region29: #{tpu_custom_call.1} parent=1 // pred_fallthru
      _
    %87 = shalt.err (0)
    %s89 = sshll.u32 %s80, 4
    %s90 = int_to_ptr.vmem [resolvable:$true] %s89
    %92 = dma.hbm_to_vmem [thread:$0]  %s79, 128, %s90, %s81
    %s93 = smul.u32 8, 1
    %s94 = smul.u32 %s93, 1
    %s95 = sshll.u32 %s94, 4
    %96 = dma.done [#allocation3], %s95
    %s97 = sshll.u32 %s94, 4
    %98 = dma.done %s49, %s97
    %s99 = sshll.u32 %s94, 4
    %100 = dma.done %s65, %s99
    %s101 = sshll.u32 %s94, 4
    %102 = dma.done %s81, %s101
    %v103 = vld [vmem:[%s1] sm:$0x1]
    %v104 = vld [vmem:[#allocation2] sm:$0xff]
    %v106 = vlaneseq
    %v107 = vshrl.u32 %v106, 7
    %v108 = vsub.s32 0, %v107
    %v109 = vrot.slane %v103, %v108
    %v111 = vmul.f32 %v104, %v109
    %112 = vadd.xlane.f32.xlu0 %v111
    %v113 = vpop.xlane.xlu0 %112
    %v114 = vld [vmem:[%s48] sm:$0xff]
    %v115 = vmul.f32 %v114, %v109
    %116 = vadd.xlane.f32.xlu0 %v115
    %v117 = vpop.xlane.xlu0 %116
    %v118 = vld [vmem:[%s64] sm:$0xff]
    %v119 = vmul.f32 %v118, %v109
    %120 = vadd.xlane.f32.xlu0 %v119
    %v121 = vpop.xlane.xlu0 %120
    %v122 = vld [vmem:[%s80] sm:$0xff]
    %v123 = vmul.f32 %v122, %v109
    %124 = vadd.xlane.f32.xlu0 %v123
    %v125 = vpop.xlane.xlu0 %124
    %v126 = vmax.f32 %v113, %v117
    %v127 = vmax.f32 %v126, %v121
    %v128 = vmax.f32 %v127, %v125
    %v129 = vsub.f32 %v113, %v128
    %v130 = vmul.f32 %v129, 1.442695
    %v131 = vpow.pop %v130
    %v132 = vsub.f32 %v117, %v128
    %v133 = vmul.f32 %v132, 1.442695
    %v134 = vpow.pop %v133
    %v135 = vsub.f32 %v121, %v128
    %v136 = vmul.f32 %v135, 1.442695
    %v137 = vpow.pop %v136
    %v138 = vsub.f32 %v125, %v128
    %v139 = vmul.f32 %v138, 1.442695
    %v140 = vpow.pop %v139
    %v141 = vadd.f32 %v131, %v134
    %v142 = vadd.f32 %v141, %v137
    %v143 = vadd.f32 %v142, %v140
    %v144 = vrcp.pop %v143
    %v145 = vmul.f32 %v131, %v144
    %v146 = vmul.f32 %v145, %v104
    %v147 = vmul.f32 %v134, %v144
    %v148 = vmul.f32 %v147, %v114
    %v149 = vadd.f32 %v146, %v148
    %v150 = vmul.f32 %v137, %v144
    %v151 = vmul.f32 %v150, %v118
    %v152 = vadd.f32 %v149, %v151
    %v153 = vmul.f32 %v140, %v144
    %v154 = vmul.f32 %v153, %v122
    %v155 = vadd.f32 %v152, %v154
    %v156 = vld [vmem:[#allocation4] sm:$0xff]
    %v157 = vld [vmem:[#allocation4 + $0x8] sm:$0xff]
    %v158 = vld [vmem:[#allocation4 + $0x10] sm:$0xff]
    %v159 = vld [vmem:[#allocation4 + $0x18] sm:$0xff]
    %v160 = vld [vmem:[#allocation4 + $0x20] sm:$0xff]
    %v161 = vld [vmem:[#allocation4 + $0x28] sm:$0xff]
    %v162 = vld [vmem:[#allocation4 + $0x30] sm:$0xff]
    %v163 = vld [vmem:[#allocation4 + $0x38] sm:$0xff]
    %v164 = vld [vmem:[#allocation4 + $0x40] sm:$0xff]
    %v165 = vld [vmem:[#allocation4 + $0x48] sm:$0xff]
    %v166 = vld [vmem:[#allocation4 + $0x50] sm:$0xff]
    %v167 = vld [vmem:[#allocation4 + $0x58] sm:$0xff]
    %v168 = vld [vmem:[#allocation4 + $0x60] sm:$0xff]
    %v169 = vld [vmem:[#allocation4 + $0x68] sm:$0xff]
    %v170 = vld [vmem:[#allocation4 + $0x70] sm:$0xff]
    %v171 = vld [vmem:[#allocation4 + $0x78] sm:$0xff]
    %172 = vmatprep.subr.mxu0 0.0
    %173 = vmatpush1.msra.mxu0 %v156
    %174 = vmatprep.subr.mxu0 0.0
    %175 = vmatpush1.msra.mxu0 %v157
    %176 = vmatprep.subr.mxu0 0.0
    %177 = vmatpush1.msra.mxu0 %v158
    %178 = vmatprep.subr.mxu0 0.0
    %179 = vmatpush1.msra.mxu0 %v159
    %180 = vmatprep.subr.mxu0 0.0
    %181 = vmatpush1.msra.mxu0 %v160
    %182 = vmatprep.subr.mxu0 0.0
    %183 = vmatpush1.msra.mxu0 %v161
    %184 = vmatprep.subr.mxu0 0.0
    %185 = vmatpush1.msra.mxu0 %v162
    %186 = vmatprep.subr.mxu0 0.0
    %187 = vmatpush1.msra.mxu0 %v163
    %188 = vmatprep.subr.mxu0 0.0
    %189 = vmatpush1.msra.mxu0 %v164
    %190 = vmatprep.subr.mxu0 0.0
    %191 = vmatpush1.msra.mxu0 %v165
    %192 = vmatprep.subr.mxu0 0.0
    %193 = vmatpush1.msra.mxu0 %v166
    %194 = vmatprep.subr.mxu0 0.0
    %195 = vmatpush1.msra.mxu0 %v167
    %196 = vmatprep.subr.mxu0 0.0
    %197 = vmatpush1.msra.mxu0 %v168
    %198 = vmatprep.subr.mxu0 0.0
    %199 = vmatpush1.msra.mxu0 %v169
    %200 = vmatprep.subr.mxu0 0.0
    %201 = vmatpush1.msra.mxu0 %v170
    %202 = vmatprep.subr.mxu0 0.0
    %203 = vmatpush1.msra.mxu0 %v171
    %204 = vmatprep.subr.mxu0 0.0
    %205 = vmatpush1.msra.mxu0 0.0
    %206 = vmatprep.subr.mxu0 0.0
    %207 = vmatpush1.msra.mxu0 0.0
    %208 = vmatprep.subr.mxu0 0.0
    %209 = vmatpush1.msra.mxu0 0.0
    %210 = vmatprep.subr.mxu0 0.0
    %211 = vmatpush1.msra.mxu0 0.0
    %212 = vmatprep.subr.mxu0 0.0
    %213 = vmatpush1.msra.mxu0 0.0
    %214 = vmatprep.subr.mxu0 0.0
    %215 = vmatpush1.msra.mxu0 0.0
    %216 = vmatprep.subr.mxu0 0.0
    %217 = vmatpush1.msra.mxu0 0.0
    %218 = vmatprep.subr.mxu0 0.0
    %219 = vmatpush1.msra.mxu0 0.0
    %220 = vmatprep.subr.mxu0 0.0
    %221 = vmatpush1.msra.mxu0 0.0
    %222 = vmatprep.subr.mxu0 0.0
    %223 = vmatpush1.msra.mxu0 0.0
    %224 = vmatprep.subr.mxu0 0.0
    %225 = vmatpush1.msra.mxu0 0.0
    %226 = vmatprep.subr.mxu0 0.0
    %227 = vmatpush1.msra.mxu0 0.0
    %228 = vmatprep.subr.mxu0 0.0
    %229 = vmatpush1.msra.mxu0 0.0
    %230 = vmatprep.subr.mxu0 0.0
    %231 = vmatpush1.msra.mxu0 0.0
    %232 = vmatprep.subr.mxu0 0.0
    %233 = vmatpush1.msra.mxu0 0.0
    %234 = vmatprep.subr.mxu0 0.0
    %235 = vmatpush1.msra.mxu0 0.0
    %236 = vmatprep.mubr.f32.mxu0 0.0
    %237 = vmatmul.mubr.f32.gmra.mrb[0].mxu0 %v155
    %v238 = vpop.f32.mrb[0].mxu0
    %v239 = vadd.f32 0.0, %v238
    %v240 = vpop.f32.mrb[0].mxu0
    %241 = vdwg.mxu0
    %242 = vst [vmem:[#allocation7] sm:$0xff] %v239
    // Predicated region
    $region30: #{tpu_custom_call.1} parent=1 // pred_check
      _
    $region31: #{tpu_custom_call.1} parent=1 // pred_check_branch
      %244 = sbr.rel (0) target = $region33
    $region32: #{tpu_custom_call.1} parent=1 // pred_region
      %s246 = ssub.s32 128, 128
      %247 = vsyncadd [#allocation6], %s246
      %s249 = sshll.u32 [#allocation7], 4
      %s250 = int_to_ptr.vmem [resolvable:$true] %s249
      %252 = dma.vmem_to_hbm [thread:$0]  %s250, 128, %s3, [#allocation6]
    $region33: #{tpu_custom_call.1} parent=1 // pred_fallthru
      _
    // Predicated region
    $region34: #{tpu_custom_call.1} parent=1 // pred_check
      _
    $region35: #{tpu_custom_call.1} parent=1 // pred_check_branch
      %254 = sbr.rel (0) target = $region37
    $region36: #{tpu_custom_call.1} parent=1 // pred_region
      %255 = dma.done [#allocation6], 128
    $region37: #{tpu_custom_call.1} parent=1 // pred_fallthru
      _
    %256 = vsyncpa [#allocation5], 1
    %257 = vsyncpa [#allocation6], 1
  %258 = vsyncmov [#allocation3]
  %s259 = vpop.sfrf %258
  %p260 = scmp.eq.s32.totalorder %s259, 0
  %p261 = pneg %p260
  %263 = shalt.err (%p261)
  %s264 = scalar_lea.sflag [#allocation3], 1
  %265 = vsyncmov %s264
  %s266 = vpop.sfrf %265
  %p267 = scmp.eq.s32.totalorder %s266, 0
  %p268 = pneg %p267
  %270 = shalt.err (%p268)
  %s271 = scalar_lea.sflag [#allocation3], 2
  %272 = vsyncmov %s271
  %s273 = vpop.sfrf %272
  %p274 = scmp.eq.s32.totalorder %s273, 0
  %p275 = pneg %p274
  %277 = shalt.err (%p275)
  %s278 = scalar_lea.sflag [#allocation3], 3
  %279 = vsyncmov %s278
  %s280 = vpop.sfrf %279
  %p281 = scmp.eq.s32.totalorder %s280, 0
  %p282 = pneg %p281
  %284 = shalt.err (%p282)

</llo_original>
